<compile_context>
chip_gen: v7x
topology: tpu7x:2x2x1
jax: 0.10.0
libtpu: 0.0.40
codegen_flags: <defaults>
</compile_context>

<pallas_src>
import jax
import jax.numpy as jnp
from jax.experimental import pallas as pl
from jax.experimental.pallas import tpu as pltpu


def sgc_kernel(alpha_sref, a_ref, xk_ref, xres_ref, o_ref):
    k = pl.program_id(2)

    @pl.when(k == 0)
    def _():
        o_ref[...] = jnp.zeros_like(o_ref)

    # MXU operands in bf16 (cast per-tile in VMEM if they arrive wider),
    # f32 accumulation into the resident output block.
    a = a_ref[...]
    if a.dtype != jnp.bfloat16:
        a = a.astype(jnp.bfloat16)
    xk = xk_ref[...]
    if xk.dtype != jnp.bfloat16:
        xk = xk.astype(jnp.bfloat16)

    o_ref[...] += jnp.dot(a, xk, preferred_element_type=jnp.float32)

    @pl.when(k == pl.num_programs(2) - 1)
    def _():
        alpha = alpha_sref[0]  # f32 scalar from SMEM
        o_ref[...] = alpha * xres_ref[...] + (1.0 - alpha) * o_ref[...]


def _pick_tile(n, cap, granule):
    """Largest power-of-two tile <= cap that divides n and is a multiple of
    `granule`; falls back to the full dim (always legal for BlockSpec)."""
    t = cap
    while t >= granule:
        if n % t == 0:
            return t
        t //= 2
    return n


def _tileset_bytes(tm, tk, tn, adj_itemsize, x_itemsize):
    # Double-buffered A tile, X[k,:] tile, residual tile, f32 output block.
    return 2 * (tm * tk * adj_itemsize
                + tk * tn * x_itemsize
                + tm * tn * x_itemsize
                + tm * tn * 4)


def sgc_forward(x, adj, alpha, *, tm=None, tn=None, tk=None):
    """x: (N, D) float32, adj: (N, N) dense row-normalized adjacency.

    Pass adj pre-cast to bf16 (once, at setup) for best HBM efficiency; f32
    adj also works (the kernel casts the tile before the MXU).
    """
    N, D = x.shape
    assert adj.shape == (N, N)

    x = x.astype(jnp.float32)

    # Lane-dense output: pad the feature dim to a multiple of 128.
    D_pad = ((D + 127) // 128) * 128
    if D_pad != D:
        x = jnp.pad(x, ((0, 0), (0, D_pad - D)))

    # Tile defaults (same on v5e/v6e/v7x): big row/contraction panels to
    # amortize per-step overhead; tn = full feature dim unless VMEM-bound.
    if tm is None:
        tm = _pick_tile(N, 1024, 8)
    if tk is None:
        tk = _pick_tile(N, 512, 128)
    if tn is None:
        tn = D_pad
        while (_tileset_bytes(tm, tk, tn, adj.dtype.itemsize, 4) > (24 << 20)
               and tn % 256 == 0):
            tn //= 2
    assert N % tm == 0 and N % tk == 0 and D_pad % tn == 0

    vmem_need = _tileset_bytes(tm, tk, tn, adj.dtype.itemsize, 4)
    vmem_limit = min(max(vmem_need + (8 << 20), 16 << 20), 48 << 20)

    alpha_arr = jnp.asarray(alpha, jnp.float32).reshape(1)

    grid = (N // tm, D_pad // tn, N // tk)

    out = pl.pallas_call(
        sgc_kernel,
        out_shape=jax.ShapeDtypeStruct((N, D_pad), jnp.float32),
        grid_spec=pltpu.PrefetchScalarGridSpec(
            num_scalar_prefetch=1,  # alpha lives in SMEM
            grid=grid,
            in_specs=[
                # adjacency tile A[i, k]
                pl.BlockSpec((tm, tk), lambda i, j, k, alpha: (i, k)),
                # x tile for the matmul K-stream: X[k, j]
                pl.BlockSpec((tk, tn), lambda i, j, k, alpha: (k, j)),
                # x tile for the residual blend: X[i, j]
                pl.BlockSpec((tm, tn), lambda i, j, k, alpha: (i, j)),
            ],
            out_specs=pl.BlockSpec((tm, tn), lambda i, j, k, alpha: (i, j)),
        ),
        compiler_params=pltpu.CompilerParams(
            dimension_semantics=("parallel", "parallel", "arbitrary"),
            vmem_limit_bytes=vmem_limit,
        ),
    )(alpha_arr, adj, x, x)

    if D_pad != D:
        out = out[:, :D]
    return out


if __name__ == "__main__":
    key = jax.random.PRNGKey(0)
    k_x, k_a = jax.random.split(key)

    N, D = 256, 128  # N nodes, D features

    x = jax.random.normal(k_x, (N, D), dtype=jnp.float32)

    # Deterministic synthetic "sparse" adjacency: ~10% density + self loops,
    # row-normalized (dense representation of torch.sparse.mm's operand).
    mask = (jax.random.uniform(k_a, (N, N)) < 0.1).astype(jnp.float32)
    mask = mask + jnp.eye(N, dtype=jnp.float32)
    adj_f32 = mask / jnp.sum(mask, axis=1, keepdims=True)

    # Cast the (reused) adjacency to bf16 ONCE at setup -- this is the
    # dominant HBM stream and the MXU's native operand dtype.
    adj_bf16 = adj_f32.astype(jnp.bfloat16)

    # nn.Parameter init_alpha = 1.0 (as in __init__), plus a non-trivial
    # alpha to exercise the blend path.
    for a in (jnp.float32(1.0), jnp.float32(0.3)):
        out = sgc_forward(x, adj_bf16, a)
        out = jax.block_until_ready(out)
        ref = a * x + (1.0 - a) * jnp.dot(
            adj_f32, x, precision=jax.lax.Precision.HIGHEST
        )
        assert out.shape == (N, D)
        # Matmul operands are bf16 (f32 accumulation), so compare against the
        # f32 reference with bf16-appropriate tolerance.
        assert jnp.allclose(out, ref, atol=2e-2, rtol=2e-2), "mismatch vs reference"

    print("KERNEL_OK")
</pallas_src>

<mosaic_0001>
module attributes {stable_mosaic.version = 11 : i64} {
  func.func @sgc_kernel(%arg0: i32, %arg1: i32, %arg2: i32, %arg3: memref<1xf32, #tpu.memory_space<smem>>, %arg4: memref<256x256xbf16, #tpu.memory_space<vmem>>, %arg5: memref<256x128xf32, #tpu.memory_space<vmem>>, %arg6: memref<256x128xf32, #tpu.memory_space<vmem>>, %arg7: memref<256x128xf32, #tpu.memory_space<vmem>>) attributes {dimension_semantics = [#tpu.dimension_semantics<parallel>, #tpu.dimension_semantics<parallel>, #tpu.dimension_semantics<arbitrary>], iteration_bounds = array<i64: 1, 1, 1>, scalar_prefetch = 1 : i64, scratch_operands = 0 : i64, tpu.core_type = #tpu.core_type<tc>, window_params = [{transform_indices = @transform_0, window_bounds = array<i64: 256, 256>}, {transform_indices = @transform_1, window_bounds = array<i64: 256, 128>}, {transform_indices = @transform_2, window_bounds = array<i64: 256, 128>}, {transform_indices = @transform_3, window_bounds = array<i64: 256, 128>}]} {
    %c0_i32 = arith.constant 0 : i32
    %0 = arith.cmpi eq, %arg2, %c0_i32 : i32
    %1 = arith.extui %0 : i1 to i32
    %c0_i32_0 = arith.constant 0 : i32
    %2 = arith.cmpi ne, %1, %c0_i32_0 : i32
    scf.if %2 {
      %cst_10 = arith.constant 0.000000e+00 : f32
      %13 = vector.broadcast %cst_10 : f32 to vector<256x128xf32>
      %c0_11 = arith.constant 0 : index
      %c0_12 = arith.constant 0 : index
      %14 = vector.load %arg7[%c0_11, %c0_12] : memref<256x128xf32, #tpu.memory_space<vmem>>, vector<256x128xf32>
      tpu.vector_store %arg7[%c0_11, %c0_12], %13 {strides = array<i32>} : memref<256x128xf32, #tpu.memory_space<vmem>>, vector<256x128xf32>,
    } else {
    }
    %c0 = arith.constant 0 : index
    %c0_1 = arith.constant 0 : index
    %3 = vector.load %arg4[%c0, %c0_1] : memref<256x256xbf16, #tpu.memory_space<vmem>>, vector<256x256xbf16>
    %c0_2 = arith.constant 0 : index
    %c0_3 = arith.constant 0 : index
    %4 = vector.load %arg5[%c0_2, %c0_3] : memref<256x128xf32, #tpu.memory_space<vmem>>, vector<256x128xf32>
    %5 = arith.truncf %4 : vector<256x128xf32> to vector<256x128xbf16>
    %c0_4 = arith.constant 0 : index
    %c0_5 = arith.constant 0 : index
    %6 = vector.load %arg7[%c0_4, %c0_5] : memref<256x128xf32, #tpu.memory_space<vmem>>, vector<256x128xf32>
    %cst = arith.constant dense<0.000000e+00> : vector<256x128xf32>
    %7 = tpu.matmul %3, %5, %cst {dimension_numbers = #tpu.dot_dimension_numbers<[1], [0], [0], [1], [0, 0, 1, 1], [], []>} : vector<256x256xbf16>, vector<256x128xbf16>, vector<256x128xf32> -> vector<256x128xf32>
    %8 = arith.addf %6, %7 : vector<256x128xf32>
    %c0_6 = arith.constant 0 : index
    %c0_7 = arith.constant 0 : index
    %9 = vector.load %arg7[%c0_6, %c0_7] : memref<256x128xf32, #tpu.memory_space<vmem>>, vector<256x128xf32>
    tpu.vector_store %arg7[%c0_6, %c0_7], %8 {strides = array<i32>} : memref<256x128xf32, #tpu.memory_space<vmem>>, vector<256x128xf32>,
    %c0_i32_8 = arith.constant 0 : i32
    %10 = arith.cmpi eq, %arg2, %c0_i32_8 : i32
    %11 = arith.extui %10 : i1 to i32
    %c0_i32_9 = arith.constant 0 : i32
    %12 = arith.cmpi ne, %11, %c0_i32_9 : i32
    scf.if %12 {
      %c0_10 = arith.constant 0 : index
      %13 = memref.load %arg3[%c0_10] : memref<1xf32, #tpu.memory_space<smem>>
      %c0_11 = arith.constant 0 : index
      %c0_12 = arith.constant 0 : index
      %14 = vector.load %arg6[%c0_11, %c0_12] : memref<256x128xf32, #tpu.memory_space<vmem>>, vector<256x128xf32>
      %15 = vector.broadcast %13 : f32 to vector<256x128xf32>
      %16 = arith.mulf %15, %14 : vector<256x128xf32>
      %cst_13 = arith.constant 1.000000e+00 : f32
      %17 = arith.subf %cst_13, %13 : f32
      %c0_14 = arith.constant 0 : index
      %c0_15 = arith.constant 0 : index
      %18 = vector.load %arg7[%c0_14, %c0_15] : memref<256x128xf32, #tpu.memory_space<vmem>>, vector<256x128xf32>
      %19 = vector.broadcast %17 : f32 to vector<256x128xf32>
      %20 = arith.mulf %19, %18 : vector<256x128xf32>
      %21 = arith.addf %16, %20 : vector<256x128xf32>
      %c0_16 = arith.constant 0 : index
      %c0_17 = arith.constant 0 : index
      %22 = vector.load %arg7[%c0_16, %c0_17] : memref<256x128xf32, #tpu.memory_space<vmem>>, vector<256x128xf32>
      tpu.vector_store %arg7[%c0_16, %c0_17], %21 {strides = array<i32>} : memref<256x128xf32, #tpu.memory_space<vmem>>, vector<256x128xf32>,
    } else {
    }
    return
  }
  func.func @transform_0(%arg0: i32, %arg1: i32, %arg2: i32, %arg3: memref<1xf32, #tpu.memory_space<smem>>) -> (i32, i32) {
    %c0_i32 = arith.constant 0 : i32
    return %arg0, %arg2 : i32, i32
  }
  func.func @transform_1(%arg0: i32, %arg1: i32, %arg2: i32, %arg3: memref<1xf32, #tpu.memory_space<smem>>) -> (i32, i32) {
    %c0_i32 = arith.constant 0 : i32
    return %arg2, %arg1 : i32, i32
  }
  func.func @transform_2(%arg0: i32, %arg1: i32, %arg2: i32, %arg3: memref<1xf32, #tpu.memory_space<smem>>) -> (i32, i32) {
    %c0_i32 = arith.constant 0 : i32
    return %arg0, %arg1 : i32, i32
  }
  func.func @transform_3(%arg0: i32, %arg1: i32, %arg2: i32, %arg3: memref<1xf32, #tpu.memory_space<smem>>) -> (i32, i32) {
    %c0_i32 = arith.constant 0 : i32
    return %arg0, %arg1 : i32, i32
  }
}

</mosaic_0001>

<llo_original>
// kernel: tpu_custom_call.1
$region0: #{tpu_custom_call.1}
  #allocation0 [shape = 'u32[]', space=smem, size = 0x4, offset = 0x4, fixed_abs, tag = 'smem constant byte address 0x4 - core index']
  #allocation1 [shape = 'u32[144,128]{1,0:T(1,128)}', space=vmem, size = 0x12000, scoped, tag = 'internal scratch']
  #allocation2 [shape = 's32[1]{0}', space=sflag, size = 0x4, scoped, tag = 'scoped memory for tpu_custom_call.1']
  #allocation3 [shape = 'f32[1]{0:T(128)S(6)}', space=smem, size = 0x200, scoped, tag = 'prefetched SMEM operand 0']
  %s0 = inlined_call_operand.<no memory space> [shape: f32[1], index: 0, kind: input, shape index: {}]
  %s1 = inlined_call_operand.hbm [shape: bf16[256,256], index: 1, kind: input, shape index: {}]
  %s2 = inlined_call_operand.hbm [shape: f32[256,128], index: 2, kind: input, shape index: {}]
  %s3 = inlined_call_operand.hbm [shape: f32[256,128], index: 3, kind: input, shape index: {}]
  %s4 = inlined_call_operand.hbm [shape: f32[256,128], index: 4, kind: output, shape index: {}]
  %s5 = sld [smem:[#allocation0]]
  $region42: #{tpu_custom_call.1} parent=0
    _
  %s7 = ssub.s32 1, %s5
  %s8 = scalar_select 0, %s7, %s5
  %9 = sst [smem:[#allocation3]] %s0
  $region1: #{tpu_custom_call.1} parent=0
    #allocation4 [shape = 'u8[131072]{0}', space=vmem, size = 0x20000, scoped, tag = 'input window, operand 1, single buffered']
    #allocation5 [shape = 's32[1]{0}', space=sflag, size = 0x4, scoped, tag = 'scoped memory for tpu_custom_call.1']
    #allocation6 [shape = 's32[1]{0}', space=sflag, size = 0x4, scoped, tag = 'scoped memory for tpu_custom_call.1']
    #allocation7 [shape = 'u8[131072]{0}', space=vmem, size = 0x20000, scoped, tag = 'input window, operand 2, single buffered']
    #allocation8 [shape = 's32[1]{0}', space=sflag, size = 0x4, scoped, tag = 'scoped memory for tpu_custom_call.1']
    #allocation9 [shape = 'u8[131072]{0}', space=vmem, size = 0x20000, scoped, tag = 'input window, operand 3, single buffered']
    #allocation10 [shape = 'u8[131072]{0}', space=vmem, size = 0x20000, scoped, tag = 'output window, operand 0, single buffered']
    %10 = vsyncpa [#allocation5], 0
    %11 = vsyncpa [#allocation8], 0
    %12 = vsyncpa [#allocation6], 0
    // Predicated region
    $region2: #{tpu_custom_call.1} parent=1 // pred_check
      _
    $region3: #{tpu_custom_call.1} parent=1 // pred_check_branch
      %14 = sbr.rel (0) target = $region5
    $region4: #{tpu_custom_call.1} parent=1 // pred_region
      %s16 = ssub.s32 4096, 4096
      %17 = vsyncadd [#allocation5], %s16
      %s18 = sshll.u32 [#allocation4], 4
      %s19 = int_to_ptr.vmem [resolvable:$true] %s18
      %24 = dma.hbm_to_vmem [thread:$0]  %s1, 4096, %s19, [#allocation5], 128, 128, 8
    $region5: #{tpu_custom_call.1} parent=1 // pred_fallthru
      _
    // Predicated region
    $region6: #{tpu_custom_call.1} parent=1 // pred_check
      _
    $region7: #{tpu_custom_call.1} parent=1 // pred_check_branch
      %26 = sbr.rel (0) target = $region9
    $region8: #{tpu_custom_call.1} parent=1 // pred_region
      %s28 = ssub.s32 4096, 4096
      %29 = vsyncadd [#allocation8], %s28
      %s30 = sshll.u32 [#allocation7], 4
      %s31 = int_to_ptr.vmem [resolvable:$true] %s30
      %36 = dma.hbm_to_vmem [thread:$0]  %s2, 4096, %s31, [#allocation8], 128, 128, 8
    $region9: #{tpu_custom_call.1} parent=1 // pred_fallthru
      _
    // Predicated region
    $region10: #{tpu_custom_call.1} parent=1 // pred_check
      _
    $region11: #{tpu_custom_call.1} parent=1 // pred_check_branch
      %38 = sbr.rel (0) target = $region13
    $region12: #{tpu_custom_call.1} parent=1 // pred_region
      %s40 = ssub.s32 4096, 4096
      %41 = vsyncadd [#allocation8], %s40
      %s42 = sshll.u32 [#allocation9], 4
      %s43 = int_to_ptr.vmem [resolvable:$true] %s42
      %48 = dma.hbm_to_vmem [thread:$0]  %s3, 4096, %s43, [#allocation8], 128, 128, 8
    $region13: #{tpu_custom_call.1} parent=1 // pred_fallthru
      _
    // Predicated region
    $region14: #{tpu_custom_call.1} parent=1 // pred_check
      _
    $region15: #{tpu_custom_call.1} parent=1 // pred_check_branch
      %50 = sbr.rel (0) target = $region17
    $region16: #{tpu_custom_call.1} parent=1 // pred_region
      %51 = dma.done [#allocation5], 4096
    $region17: #{tpu_custom_call.1} parent=1 // pred_fallthru
      _
    // Predicated region
    $region18: #{tpu_custom_call.1} parent=1 // pred_check
      _
    $region19: #{tpu_custom_call.1} parent=1 // pred_check_branch
      %53 = sbr.rel (0) target = $region21
    $region20: #{tpu_custom_call.1} parent=1 // pred_region
      %54 = dma.done [#allocation8], 4096
    $region21: #{tpu_custom_call.1} parent=1 // pred_fallthru
      _
    // Predicated region
    $region22: #{tpu_custom_call.1} parent=1 // pred_check
      _
    $region23: #{tpu_custom_call.1} parent=1 // pred_check_branch
      %56 = sbr.rel (0) target = $region25
    $region24: #{tpu_custom_call.1} parent=1 // pred_region
      %57 = dma.done [#allocation8], 4096
    $region25: #{tpu_custom_call.1} parent=1 // pred_fallthru
      _
    %p59 = scmp.eq.s32.totalorder 0, 0
    // Predicated region
    $region26: #{tpu_custom_call.1} parent=1 // pred_check
      %p60 = pneg %p59
    $region27: #{tpu_custom_call.1} parent=1 // pred_check_branch
      %62 = sbr.rel (%p60) target = $region29
    $region28: #{tpu_custom_call.1} parent=1 // pred_region
      %63 = vst [vmem:[#allocation10] sm:$0xff] 0.0
      %64 = vst [vmem:[#allocation10 + $0x8] sm:$0xff] 0.0
      %65 = vst [vmem:[#allocation10 + $0x10] sm:$0xff] 0.0
      %66 = vst [vmem:[#allocation10 + $0x18] sm:$0xff] 0.0
      %67 = vst [vmem:[#allocation10 + $0x20] sm:$0xff] 0.0
      %68 = vst [vmem:[#allocation10 + $0x28] sm:$0xff] 0.0
      %69 = vst [vmem:[#allocation10 + $0x30] sm:$0xff] 0.0
      %70 = vst [vmem:[#allocation10 + $0x38] sm:$0xff] 0.0
      %71 = vst [vmem:[#allocation10 + $0x40] sm:$0xff] 0.0
      %72 = vst [vmem:[#allocation10 + $0x48] sm:$0xff] 0.0
      %73 = vst [vmem:[#allocation10 + $0x50] sm:$0xff] 0.0
      %74 = vst [vmem:[#allocation10 + $0x58] sm:$0xff] 0.0
      %75 = vst [vmem:[#allocation10 + $0x60] sm:$0xff] 0.0
      %76 = vst [vmem:[#allocation10 + $0x68] sm:$0xff] 0.0
      %77 = vst [vmem:[#allocation10 + $0x70] sm:$0xff] 0.0
      %78 = vst [vmem:[#allocation10 + $0x78] sm:$0xff] 0.0
      %79 = vst [vmem:[#allocation10 + $0x80] sm:$0xff] 0.0
      %80 = vst [vmem:[#allocation10 + $0x88] sm:$0xff] 0.0
      %81 = vst [vmem:[#allocation10 + $0x90] sm:$0xff] 0.0
      %82 = vst [vmem:[#allocation10 + $0x98] sm:$0xff] 0.0
      %83 = vst [vmem:[#allocation10 + $0xa0] sm:$0xff] 0.0
      %84 = vst [vmem:[#allocation10 + $0xa8] sm:$0xff] 0.0
      %85 = vst [vmem:[#allocation10 + $0xb0] sm:$0xff] 0.0
      %86 = vst [vmem:[#allocation10 + $0xb8] sm:$0xff] 0.0
      %87 = vst [vmem:[#allocation10 + $0xc0] sm:$0xff] 0.0
      %88 = vst [vmem:[#allocation10 + $0xc8] sm:$0xff] 0.0
      %89 = vst [vmem:[#allocation10 + $0xd0] sm:$0xff] 0.0
      %90 = vst [vmem:[#allocation10 + $0xd8] sm:$0xff] 0.0
      %91 = vst [vmem:[#allocation10 + $0xe0] sm:$0xff] 0.0
      %92 = vst [vmem:[#allocation10 + $0xe8] sm:$0xff] 0.0
      %93 = vst [vmem:[#allocation10 + $0xf0] sm:$0xff] 0.0
      %94 = vst [vmem:[#allocation10 + $0xf8] sm:$0xff] 0.0
    $region29: #{tpu_custom_call.1} parent=1 // pred_fallthru
      _
    %v95 = vld [vmem:[#allocation4] sm:$0xff]
    %v96 = vld [vmem:[#allocation4 + $0x8] sm:$0xff]
    %v97 = vld [vmem:[#allocation4 + $0x10] sm:$0xff]
    %v98 = vld [vmem:[#allocation4 + $0x18] sm:$0xff]
    %v99 = vld [vmem:[#allocation4 + $0x20] sm:$0xff]
    %v100 = vld [vmem:[#allocation4 + $0x28] sm:$0xff]
    %v101 = vld [vmem:[#allocation4 + $0x30] sm:$0xff]
    %v102 = vld [vmem:[#allocation4 + $0x38] sm:$0xff]
    %v103 = vld [vmem:[#allocation4 + $0x40] sm:$0xff]
    %v104 = vld [vmem:[#allocation4 + $0x48] sm:$0xff]
    %v105 = vld [vmem:[#allocation4 + $0x50] sm:$0xff]
    %v106 = vld [vmem:[#allocation4 + $0x58] sm:$0xff]
    %v107 = vld [vmem:[#allocation4 + $0x60] sm:$0xff]
    %v108 = vld [vmem:[#allocation4 + $0x68] sm:$0xff]
    %v109 = vld [vmem:[#allocation4 + $0x70] sm:$0xff]
    %v110 = vld [vmem:[#allocation4 + $0x78] sm:$0xff]
    %v111 = vld [vmem:[#allocation4 + $0x80] sm:$0xff]
    %v112 = vld [vmem:[#allocation4 + $0x88] sm:$0xff]
    %v113 = vld [vmem:[#allocation4 + $0x90] sm:$0xff]
    %v114 = vld [vmem:[#allocation4 + $0x98] sm:$0xff]
    %v115 = vld [vmem:[#allocation4 + $0xa0] sm:$0xff]
    %v116 = vld [vmem:[#allocation4 + $0xa8] sm:$0xff]
    %v117 = vld [vmem:[#allocation4 + $0xb0] sm:$0xff]
    %v118 = vld [vmem:[#allocation4 + $0xb8] sm:$0xff]
    %v119 = vld [vmem:[#allocation4 + $0xc0] sm:$0xff]
    %v120 = vld [vmem:[#allocation4 + $0xc8] sm:$0xff]
    %v121 = vld [vmem:[#allocation4 + $0xd0] sm:$0xff]
    %v122 = vld [vmem:[#allocation4 + $0xd8] sm:$0xff]
    %v123 = vld [vmem:[#allocation4 + $0xe0] sm:$0xff]
    %v124 = vld [vmem:[#allocation4 + $0xe8] sm:$0xff]
    %v125 = vld [vmem:[#allocation4 + $0xf0] sm:$0xff]
    %v126 = vld [vmem:[#allocation4 + $0xf8] sm:$0xff]
    %v127 = vld [vmem:[#allocation7] sm:$0xff]
    %v128 = vld [vmem:[#allocation7 + $0x8] sm:$0xff]
    %v129 = vld [vmem:[#allocation7 + $0x10] sm:$0xff]
    %v130 = vld [vmem:[#allocation7 + $0x18] sm:$0xff]
    %v131 = vld [vmem:[#allocation7 + $0x20] sm:$0xff]
    %v132 = vld [vmem:[#allocation7 + $0x28] sm:$0xff]
    %v133 = vld [vmem:[#allocation7 + $0x30] sm:$0xff]
    %v134 = vld [vmem:[#allocation7 + $0x38] sm:$0xff]
    %v135 = vld [vmem:[#allocation7 + $0x40] sm:$0xff]
    %v136 = vld [vmem:[#allocation7 + $0x48] sm:$0xff]
    %v137 = vld [vmem:[#allocation7 + $0x50] sm:$0xff]
    %v138 = vld [vmem:[#allocation7 + $0x58] sm:$0xff]
    %v139 = vld [vmem:[#allocation7 + $0x60] sm:$0xff]
    %v140 = vld [vmem:[#allocation7 + $0x68] sm:$0xff]
    %v141 = vld [vmem:[#allocation7 + $0x70] sm:$0xff]
    %v142 = vld [vmem:[#allocation7 + $0x78] sm:$0xff]
    %v143 = vld [vmem:[#allocation7 + $0x80] sm:$0xff]
    %v144 = vld [vmem:[#allocation7 + $0x88] sm:$0xff]
    %v145 = vld [vmem:[#allocation7 + $0x90] sm:$0xff]
    %v146 = vld [vmem:[#allocation7 + $0x98] sm:$0xff]
    %v147 = vld [vmem:[#allocation7 + $0xa0] sm:$0xff]
    %v148 = vld [vmem:[#allocation7 + $0xa8] sm:$0xff]
    %v149 = vld [vmem:[#allocation7 + $0xb0] sm:$0xff]
    %v150 = vld [vmem:[#allocation7 + $0xb8] sm:$0xff]
    %v151 = vld [vmem:[#allocation7 + $0xc0] sm:$0xff]
    %v152 = vld [vmem:[#allocation7 + $0xc8] sm:$0xff]
    %v153 = vld [vmem:[#allocation7 + $0xd0] sm:$0xff]
    %v154 = vld [vmem:[#allocation7 + $0xd8] sm:$0xff]
    %v155 = vld [vmem:[#allocation7 + $0xe0] sm:$0xff]
    %v156 = vld [vmem:[#allocation7 + $0xe8] sm:$0xff]
    %v157 = vld [vmem:[#allocation7 + $0xf0] sm:$0xff]
    %v158 = vld [vmem:[#allocation7 + $0xf8] sm:$0xff]
    %v159 = vpack.c.bf16 %v128, %v127
    %v160 = vpack.c.bf16 %v130, %v129
    %v161 = vpack.c.bf16 %v132, %v131
    %v162 = vpack.c.bf16 %v134, %v133
    %v163 = vpack.c.bf16 %v136, %v135
    %v164 = vpack.c.bf16 %v138, %v137
    %v165 = vpack.c.bf16 %v140, %v139
    %v166 = vpack.c.bf16 %v142, %v141
    %v167 = vpack.c.bf16 %v144, %v143
    %v168 = vpack.c.bf16 %v146, %v145
    %v169 = vpack.c.bf16 %v148, %v147
    %v170 = vpack.c.bf16 %v150, %v149
    %v171 = vpack.c.bf16 %v152, %v151
    %v172 = vpack.c.bf16 %v154, %v153
    %v173 = vpack.c.bf16 %v156, %v155
    %v174 = vpack.c.bf16 %v158, %v157
    %v175 = vld [vmem:[#allocation10] sm:$0xff]
    %v176 = vld [vmem:[#allocation10 + $0x8] sm:$0xff]
    %v177 = vld [vmem:[#allocation10 + $0x10] sm:$0xff]
    %v178 = vld [vmem:[#allocation10 + $0x18] sm:$0xff]
    %v179 = vld [vmem:[#allocation10 + $0x20] sm:$0xff]
    %v180 = vld [vmem:[#allocation10 + $0x28] sm:$0xff]
    %v181 = vld [vmem:[#allocation10 + $0x30] sm:$0xff]
    %v182 = vld [vmem:[#allocation10 + $0x38] sm:$0xff]
    %v183 = vld [vmem:[#allocation10 + $0x40] sm:$0xff]
    %v184 = vld [vmem:[#allocation10 + $0x48] sm:$0xff]
    %v185 = vld [vmem:[#allocation10 + $0x50] sm:$0xff]
    %v186 = vld [vmem:[#allocation10 + $0x58] sm:$0xff]
    %v187 = vld [vmem:[#allocation10 + $0x60] sm:$0xff]
    %v188 = vld [vmem:[#allocation10 + $0x68] sm:$0xff]
    %v189 = vld [vmem:[#allocation10 + $0x70] sm:$0xff]
    %v190 = vld [vmem:[#allocation10 + $0x78] sm:$0xff]
    %v191 = vld [vmem:[#allocation10 + $0x80] sm:$0xff]
    %v192 = vld [vmem:[#allocation10 + $0x88] sm:$0xff]
    %v193 = vld [vmem:[#allocation10 + $0x90] sm:$0xff]
    %v194 = vld [vmem:[#allocation10 + $0x98] sm:$0xff]
    %v195 = vld [vmem:[#allocation10 + $0xa0] sm:$0xff]
    %v196 = vld [vmem:[#allocation10 + $0xa8] sm:$0xff]
    %v197 = vld [vmem:[#allocation10 + $0xb0] sm:$0xff]
    %v198 = vld [vmem:[#allocation10 + $0xb8] sm:$0xff]
    %v199 = vld [vmem:[#allocation10 + $0xc0] sm:$0xff]
    %v200 = vld [vmem:[#allocation10 + $0xc8] sm:$0xff]
    %v201 = vld [vmem:[#allocation10 + $0xd0] sm:$0xff]
    %v202 = vld [vmem:[#allocation10 + $0xd8] sm:$0xff]
    %v203 = vld [vmem:[#allocation10 + $0xe0] sm:$0xff]
    %v204 = vld [vmem:[#allocation10 + $0xe8] sm:$0xff]
    %v205 = vld [vmem:[#allocation10 + $0xf0] sm:$0xff]
    %v206 = vld [vmem:[#allocation10 + $0xf8] sm:$0xff]
    %v239 = vunpack.c.l.b16 %v95
    %v240 = vunpack.c.h.b16 %v95
    %v241 = vunpack.c.l.b16 %v96
    %v242 = vunpack.c.h.b16 %v96
    %v243 = vunpack.c.l.b16 %v97
    %v244 = vunpack.c.h.b16 %v97
    %v245 = vunpack.c.l.b16 %v98
    %v246 = vunpack.c.h.b16 %v98
    %v247 = vunpack.c.l.b16 %v99
    %v248 = vunpack.c.h.b16 %v99
    %v249 = vunpack.c.l.b16 %v100
    %v250 = vunpack.c.h.b16 %v100
    %v251 = vunpack.c.l.b16 %v101
    %v252 = vunpack.c.h.b16 %v101
    %v253 = vunpack.c.l.b16 %v102
    %v254 = vunpack.c.h.b16 %v102
    %v255 = vunpack.c.l.b16 %v103
    %v256 = vunpack.c.h.b16 %v103
    %v257 = vunpack.c.l.b16 %v104
    %v258 = vunpack.c.h.b16 %v104
    %v259 = vunpack.c.l.b16 %v105
    %v260 = vunpack.c.h.b16 %v105
    %v261 = vunpack.c.l.b16 %v106
    %v262 = vunpack.c.h.b16 %v106
    %v263 = vunpack.c.l.b16 %v107
    %v264 = vunpack.c.h.b16 %v107
    %v265 = vunpack.c.l.b16 %v108
    %v266 = vunpack.c.h.b16 %v108
    %v267 = vunpack.c.l.b16 %v109
    %v268 = vunpack.c.h.b16 %v109
    %v269 = vunpack.c.l.b16 %v110
    %v270 = vunpack.c.h.b16 %v110
    %v271 = vunpack.c.l.b16 %v111
    %v272 = vunpack.c.h.b16 %v111
    %v273 = vunpack.c.l.b16 %v112
    %v274 = vunpack.c.h.b16 %v112
    %v275 = vunpack.c.l.b16 %v113
    %v276 = vunpack.c.h.b16 %v113
    %v277 = vunpack.c.l.b16 %v114
    %v278 = vunpack.c.h.b16 %v114
    %v279 = vunpack.c.l.b16 %v115
    %v280 = vunpack.c.h.b16 %v115
    %v281 = vunpack.c.l.b16 %v116
    %v282 = vunpack.c.h.b16 %v116
    %v283 = vunpack.c.l.b16 %v117
    %v284 = vunpack.c.h.b16 %v117
    %v285 = vunpack.c.l.b16 %v118
    %v286 = vunpack.c.h.b16 %v118
    %v287 = vunpack.c.l.b16 %v119
    %v288 = vunpack.c.h.b16 %v119
    %v289 = vunpack.c.l.b16 %v120
    %v290 = vunpack.c.h.b16 %v120
    %v291 = vunpack.c.l.b16 %v121
    %v292 = vunpack.c.h.b16 %v121
    %v293 = vunpack.c.l.b16 %v122
    %v294 = vunpack.c.h.b16 %v122
    %v295 = vunpack.c.l.b16 %v123
    %v296 = vunpack.c.h.b16 %v123
    %v297 = vunpack.c.l.b16 %v124
    %v298 = vunpack.c.h.b16 %v124
    %v299 = vunpack.c.l.b16 %v125
    %v300 = vunpack.c.h.b16 %v125
    %v301 = vunpack.c.l.b16 %v126
    %v302 = vunpack.c.h.b16 %v126
    %v303 = vpack.c.b16 %v241, %v239
    %v304 = vpack.c.b16 %v242, %v240
    %v305 = vpack.c.b16 %v245, %v243
    %v306 = vpack.c.b16 %v246, %v244
    %v307 = vpack.c.b16 %v249, %v247
    %v308 = vpack.c.b16 %v250, %v248
    %v309 = vpack.c.b16 %v253, %v251
    %v310 = vpack.c.b16 %v254, %v252
    %v311 = vpack.c.b16 %v257, %v255
    %v312 = vpack.c.b16 %v258, %v256
    %v313 = vpack.c.b16 %v261, %v259
    %v314 = vpack.c.b16 %v262, %v260
    %v315 = vpack.c.b16 %v265, %v263
    %v316 = vpack.c.b16 %v266, %v264
    %v317 = vpack.c.b16 %v269, %v267
    %v318 = vpack.c.b16 %v270, %v268
    %v319 = vpack.c.b16 %v273, %v271
    %v320 = vpack.c.b16 %v274, %v272
    %v321 = vpack.c.b16 %v277, %v275
    %v322 = vpack.c.b16 %v278, %v276
    %v323 = vpack.c.b16 %v281, %v279
    %v324 = vpack.c.b16 %v282, %v280
    %v325 = vpack.c.b16 %v285, %v283
    %v326 = vpack.c.b16 %v286, %v284
    %v327 = vpack.c.b16 %v289, %v287
    %v328 = vpack.c.b16 %v290, %v288
    %v329 = vpack.c.b16 %v293, %v291
    %v330 = vpack.c.b16 %v294, %v292
    %v331 = vpack.c.b16 %v297, %v295
    %v332 = vpack.c.b16 %v298, %v296
    %v333 = vpack.c.b16 %v301, %v299
    %v334 = vpack.c.b16 %v302, %v300
    %367 = vmatprep.subr.bf16.mxu0 0
    %368 = vmatpush1.bf16.msra.mxu0 %v159
    %369 = vmatprep.subr.bf16.mxu0 0
    %370 = vmatpush1.bf16.msra.mxu0 %v160
    %371 = vmatprep.subr.bf16.mxu0 0
    %372 = vmatpush1.bf16.msra.mxu0 %v161
    %373 = vmatprep.subr.bf16.mxu0 0
    %374 = vmatpush1.bf16.msra.mxu0 %v162
    %375 = vmatprep.subr.bf16.mxu0 0
    %376 = vmatpush1.bf16.msra.mxu0 %v163
    %377 = vmatprep.subr.bf16.mxu0 0
    %378 = vmatpush1.bf16.msra.mxu0 %v164
    %379 = vmatprep.subr.bf16.mxu0 0
    %380 = vmatpush1.bf16.msra.mxu0 %v165
    %381 = vmatprep.subr.bf16.mxu0 0
    %382 = vmatpush1.bf16.msra.mxu0 %v166
    %383 = vmatprep.subr.bf16.mxu0 0
    %384 = vmatpush1.bf16.msra.mxu0 %v167
    %385 = vmatprep.subr.bf16.mxu0 0
    %386 = vmatpush1.bf16.msra.mxu0 %v168
    %387 = vmatprep.subr.bf16.mxu0 0
    %388 = vmatpush1.bf16.msra.mxu0 %v169
    %389 = vmatprep.subr.bf16.mxu0 0
    %390 = vmatpush1.bf16.msra.mxu0 %v170
    %391 = vmatprep.subr.bf16.mxu0 0
    %392 = vmatpush1.bf16.msra.mxu0 %v171
    %393 = vmatprep.subr.bf16.mxu0 0
    %394 = vmatpush1.bf16.msra.mxu0 %v172
    %395 = vmatprep.subr.bf16.mxu0 0
    %396 = vmatpush1.bf16.msra.mxu0 %v173
    %397 = vmatprep.subr.bf16.mxu0 0
    %398 = vmatpush1.bf16.msra.mxu0 %v174
    %399 = vmatprep.mubr.bf16.mxu0 %v304
    %400 = vmatmul.mubr.bf16.gmra.mrb[0].mxu0 %v303
    %v401 = vpop.f32.mrb[0].mxu0
    %v402 = vadd.f32 0.0, %v401
    %v403 = vpop.f32.mrb[0].mxu0
    %v404 = vpop.f32.mrb[0].mxu0
    %v405 = vadd.f32 0.0, %v404
    %v406 = vpop.f32.mrb[0].mxu0
    %407 = vmatprep.mubr.bf16.mxu0 %v306
    %408 = vmatmul.mubr.bf16.gmra.mrb[0].mxu0 %v305
    %v409 = vpop.f32.mrb[0].mxu0
    %v410 = vadd.f32 0.0, %v409
    %v411 = vpop.f32.mrb[0].mxu0
    %v412 = vpop.f32.mrb[0].mxu0
    %v413 = vadd.f32 0.0, %v412
    %v414 = vpop.f32.mrb[0].mxu0
    %415 = vmatprep.mubr.bf16.mxu0 %v308
    %416 = vmatmul.mubr.bf16.gmra.mrb[0].mxu0 %v307
    %v417 = vpop.f32.mrb[0].mxu0
    %v418 = vadd.f32 0.0, %v417
    %v419 = vpop.f32.mrb[0].mxu0
    %v420 = vpop.f32.mrb[0].mxu0
    %v421 = vadd.f32 0.0, %v420
    %v422 = vpop.f32.mrb[0].mxu0
    %423 = vmatprep.mubr.bf16.mxu0 %v310
    %424 = vmatmul.mubr.bf16.gmra.mrb[0].mxu0 %v309
    %v425 = vpop.f32.mrb[0].mxu0
    %v426 = vadd.f32 0.0, %v425
    %v427 = vpop.f32.mrb[0].mxu0
    %v428 = vpop.f32.mrb[0].mxu0
    %v429 = vadd.f32 0.0, %v428
    %v430 = vpop.f32.mrb[0].mxu0
    %431 = vmatprep.mubr.bf16.mxu0 %v312
    %432 = vmatmul.mubr.bf16.gmra.mrb[0].mxu0 %v311
    %v433 = vpop.f32.mrb[0].mxu0
    %v434 = vadd.f32 0.0, %v433
    %v435 = vpop.f32.mrb[0].mxu0
    %v436 = vpop.f32.mrb[0].mxu0
    %v437 = vadd.f32 0.0, %v436
    %v438 = vpop.f32.mrb[0].mxu0
    %439 = vmatprep.mubr.bf16.mxu0 %v314
    %440 = vmatmul.mubr.bf16.gmra.mrb[0].mxu0 %v313
    %v441 = vpop.f32.mrb[0].mxu0
    %v442 = vadd.f32 0.0, %v441
    %v443 = vpop.f32.mrb[0].mxu0
    %v444 = vpop.f32.mrb[0].mxu0
    %v445 = vadd.f32 0.0, %v444
    %v446 = vpop.f32.mrb[0].mxu0
    %447 = vmatprep.mubr.bf16.mxu0 %v316
    %448 = vmatmul.mubr.bf16.gmra.mrb[0].mxu0 %v315
    %v449 = vpop.f32.mrb[0].mxu0
    %v450 = vadd.f32 0.0, %v449
    %v451 = vpop.f32.mrb[0].mxu0
    %v452 = vpop.f32.mrb[0].mxu0
    %v453 = vadd.f32 0.0, %v452
    %v454 = vpop.f32.mrb[0].mxu0
    %455 = vmatprep.mubr.bf16.mxu0 %v318
    %456 = vmatmul.mubr.bf16.gmra.mrb[0].mxu0 %v317
    %v457 = vpop.f32.mrb[0].mxu0
    %v458 = vadd.f32 0.0, %v457
    %v459 = vpop.f32.mrb[0].mxu0
    %v460 = vpop.f32.mrb[0].mxu0
    %v461 = vadd.f32 0.0, %v460
    %v462 = vpop.f32.mrb[0].mxu0
    %463 = vmatprep.mubr.bf16.mxu0 %v320
    %464 = vmatmul.mubr.bf16.gmra.mrb[0].mxu0 %v319
    %v465 = vpop.f32.mrb[0].mxu0
    %v466 = vadd.f32 0.0, %v465
    %v467 = vpop.f32.mrb[0].mxu0
    %v468 = vpop.f32.mrb[0].mxu0
    %v469 = vadd.f32 0.0, %v468
    %v470 = vpop.f32.mrb[0].mxu0
    %471 = vmatprep.mubr.bf16.mxu0 %v322
    %472 = vmatmul.mubr.bf16.gmra.mrb[0].mxu0 %v321
    %v473 = vpop.f32.mrb[0].mxu0
    %v474 = vadd.f32 0.0, %v473
    %v475 = vpop.f32.mrb[0].mxu0
    %v476 = vpop.f32.mrb[0].mxu0
    %v477 = vadd.f32 0.0, %v476
    %v478 = vpop.f32.mrb[0].mxu0
    %479 = vmatprep.mubr.bf16.mxu0 %v324
    %480 = vmatmul.mubr.bf16.gmra.mrb[0].mxu0 %v323
    %v481 = vpop.f32.mrb[0].mxu0
    %v482 = vadd.f32 0.0, %v481
    %v483 = vpop.f32.mrb[0].mxu0
    %v484 = vpop.f32.mrb[0].mxu0
    %v485 = vadd.f32 0.0, %v484
    %v486 = vpop.f32.mrb[0].mxu0
    %487 = vmatprep.mubr.bf16.mxu0 %v326
    %488 = vmatmul.mubr.bf16.gmra.mrb[0].mxu0 %v325
    %v489 = vpop.f32.mrb[0].mxu0
    %v490 = vadd.f32 0.0, %v489
    %v491 = vpop.f32.mrb[0].mxu0
    %v492 = vpop.f32.mrb[0].mxu0
    %v493 = vadd.f32 0.0, %v492
    %v494 = vpop.f32.mrb[0].mxu0
    %495 = vmatprep.mubr.bf16.mxu0 %v328
    %496 = vmatmul.mubr.bf16.gmra.mrb[0].mxu0 %v327
    %v497 = vpop.f32.mrb[0].mxu0
    %v498 = vadd.f32 0.0, %v497
    %v499 = vpop.f32.mrb[0].mxu0
    %v500 = vpop.f32.mrb[0].mxu0
    %v501 = vadd.f32 0.0, %v500
    %v502 = vpop.f32.mrb[0].mxu0
    %503 = vmatprep.mubr.bf16.mxu0 %v330
    %504 = vmatmul.mubr.bf16.gmra.mrb[0].mxu0 %v329
    %v505 = vpop.f32.mrb[0].mxu0
    %v506 = vadd.f32 0.0, %v505
    %v507 = vpop.f32.mrb[0].mxu0
    %v508 = vpop.f32.mrb[0].mxu0
    %v509 = vadd.f32 0.0, %v508
    %v510 = vpop.f32.mrb[0].mxu0
    %511 = vmatprep.mubr.bf16.mxu0 %v332
    %512 = vmatmul.mubr.bf16.gmra.mrb[0].mxu0 %v331
    %v513 = vpop.f32.mrb[0].mxu0
    %v514 = vadd.f32 0.0, %v513
    %v515 = vpop.f32.mrb[0].mxu0
    %v516 = vpop.f32.mrb[0].mxu0
    %v517 = vadd.f32 0.0, %v516
    %v518 = vpop.f32.mrb[0].mxu0
    %519 = vmatprep.mubr.bf16.mxu0 %v334
    %520 = vmatmul.mubr.bf16.gmra.mrb[0].mxu0 %v333
    %v521 = vpop.f32.mrb[0].mxu0
    %v522 = vadd.f32 0.0, %v521
    %v523 = vpop.f32.mrb[0].mxu0
    %v524 = vpop.f32.mrb[0].mxu0
    %v525 = vadd.f32 0.0, %v524
    %v526 = vpop.f32.mrb[0].mxu0
    %527 = vdwg.mxu0
    %v528 = vadd.f32 %v175, %v402
    %v529 = vadd.f32 %v176, %v405
    %v530 = vadd.f32 %v177, %v410
    %v531 = vadd.f32 %v178, %v413
    %v532 = vadd.f32 %v179, %v418
    %v533 = vadd.f32 %v180, %v421
    %v534 = vadd.f32 %v181, %v426
    %v535 = vadd.f32 %v182, %v429
    %v536 = vadd.f32 %v183, %v434
    %v537 = vadd.f32 %v184, %v437
    %v538 = vadd.f32 %v185, %v442
    %v539 = vadd.f32 %v186, %v445
    %v540 = vadd.f32 %v187, %v450
    %v541 = vadd.f32 %v188, %v453
    %v542 = vadd.f32 %v189, %v458
    %v543 = vadd.f32 %v190, %v461
    %v544 = vadd.f32 %v191, %v466
    %v545 = vadd.f32 %v192, %v469
    %v546 = vadd.f32 %v193, %v474
    %v547 = vadd.f32 %v194, %v477
    %v548 = vadd.f32 %v195, %v482
    %v549 = vadd.f32 %v196, %v485
    %v550 = vadd.f32 %v197, %v490
    %v551 = vadd.f32 %v198, %v493
    %v552 = vadd.f32 %v199, %v498
    %v553 = vadd.f32 %v200, %v501
    %v554 = vadd.f32 %v201, %v506
    %v555 = vadd.f32 %v202, %v509
    %v556 = vadd.f32 %v203, %v514
    %v557 = vadd.f32 %v204, %v517
    %v558 = vadd.f32 %v205, %v522
    %v559 = vadd.f32 %v206, %v525
    %560 = vst [vmem:[#allocation10] sm:$0xff] %v528
    %561 = vst [vmem:[#allocation10 + $0x8] sm:$0xff] %v529
    %562 = vst [vmem:[#allocation10 + $0x10] sm:$0xff] %v530
    %563 = vst [vmem:[#allocation10 + $0x18] sm:$0xff] %v531
    %564 = vst [vmem:[#allocation10 + $0x20] sm:$0xff] %v532
    %565 = vst [vmem:[#allocation10 + $0x28] sm:$0xff] %v533
    %566 = vst [vmem:[#allocation10 + $0x30] sm:$0xff] %v534
    %567 = vst [vmem:[#allocation10 + $0x38] sm:$0xff] %v535
    %568 = vst [vmem:[#allocation10 + $0x40] sm:$0xff] %v536
    %569 = vst [vmem:[#allocation10 + $0x48] sm:$0xff] %v537
    %570 = vst [vmem:[#allocation10 + $0x50] sm:$0xff] %v538
    %571 = vst [vmem:[#allocation10 + $0x58] sm:$0xff] %v539
    %572 = vst [vmem:[#allocation10 + $0x60] sm:$0xff] %v540
    %573 = vst [vmem:[#allocation10 + $0x68] sm:$0xff] %v541
    %574 = vst [vmem:[#allocation10 + $0x70] sm:$0xff] %v542
    %575 = vst [vmem:[#allocation10 + $0x78] sm:$0xff] %v543
    %576 = vst [vmem:[#allocation10 + $0x80] sm:$0xff] %v544
    %577 = vst [vmem:[#allocation10 + $0x88] sm:$0xff] %v545
    %578 = vst [vmem:[#allocation10 + $0x90] sm:$0xff] %v546
    %579 = vst [vmem:[#allocation10 + $0x98] sm:$0xff] %v547
    %580 = vst [vmem:[#allocation10 + $0xa0] sm:$0xff] %v548
    %581 = vst [vmem:[#allocation10 + $0xa8] sm:$0xff] %v549
    %582 = vst [vmem:[#allocation10 + $0xb0] sm:$0xff] %v550
    %583 = vst [vmem:[#allocation10 + $0xb8] sm:$0xff] %v551
    %584 = vst [vmem:[#allocation10 + $0xc0] sm:$0xff] %v552
    %585 = vst [vmem:[#allocation10 + $0xc8] sm:$0xff] %v553
    %586 = vst [vmem:[#allocation10 + $0xd0] sm:$0xff] %v554
    %587 = vst [vmem:[#allocation10 + $0xd8] sm:$0xff] %v555
    %588 = vst [vmem:[#allocation10 + $0xe0] sm:$0xff] %v556
    %589 = vst [vmem:[#allocation10 + $0xe8] sm:$0xff] %v557
    %590 = vst [vmem:[#allocation10 + $0xf0] sm:$0xff] %v558
    %591 = vst [vmem:[#allocation10 + $0xf8] sm:$0xff] %v559
    // Predicated region
    $region30: #{tpu_custom_call.1} parent=1 // pred_check
      %p592 = pneg %p59
    $region31: #{tpu_custom_call.1} parent=1 // pred_check_branch
      %594 = sbr.rel (%p592) target = $region33
    $region32: #{tpu_custom_call.1} parent=1 // pred_region
      %s595 = sld [smem:[#allocation3]]
      %v596 = vld [vmem:[#allocation9] sm:$0xff]
      %v597 = vld [vmem:[#allocation9 + $0x8] sm:$0xff]
      %v598 = vld [vmem:[#allocation9 + $0x10] sm:$0xff]
      %v599 = vld [vmem:[#allocation9 + $0x18] sm:$0xff]
      %v600 = vld [vmem:[#allocation9 + $0x20] sm:$0xff]
      %v601 = vld [vmem:[#allocation9 + $0x28] sm:$0xff]
      %v602 = vld [vmem:[#allocation9 + $0x30] sm:$0xff]
      %v603 = vld [vmem:[#allocation9 + $0x38] sm:$0xff]
      %v604 = vld [vmem:[#allocation9 + $0x40] sm:$0xff]
      %v605 = vld [vmem:[#allocation9 + $0x48] sm:$0xff]
      %v606 = vld [vmem:[#allocation9 + $0x50] sm:$0xff]
      %v607 = vld [vmem:[#allocation9 + $0x58] sm:$0xff]
      %v608 = vld [vmem:[#allocation9 + $0x60] sm:$0xff]
      %v609 = vld [vmem:[#allocation9 + $0x68] sm:$0xff]
      %v610 = vld [vmem:[#allocation9 + $0x70] sm:$0xff]
      %v611 = vld [vmem:[#allocation9 + $0x78] sm:$0xff]
      %v612 = vld [vmem:[#allocation9 + $0x80] sm:$0xff]
      %v613 = vld [vmem:[#allocation9 + $0x88] sm:$0xff]
      %v614 = vld [vmem:[#allocation9 + $0x90] sm:$0xff]
      %v615 = vld [vmem:[#allocation9 + $0x98] sm:$0xff]
      %v616 = vld [vmem:[#allocation9 + $0xa0] sm:$0xff]
      %v617 = vld [vmem:[#allocation9 + $0xa8] sm:$0xff]
      %v618 = vld [vmem:[#allocation9 + $0xb0] sm:$0xff]
      %v619 = vld [vmem:[#allocation9 + $0xb8] sm:$0xff]
      %v620 = vld [vmem:[#allocation9 + $0xc0] sm:$0xff]
      %v621 = vld [vmem:[#allocation9 + $0xc8] sm:$0xff]
      %v622 = vld [vmem:[#allocation9 + $0xd0] sm:$0xff]
      %v623 = vld [vmem:[#allocation9 + $0xd8] sm:$0xff]
      %v624 = vld [vmem:[#allocation9 + $0xe0] sm:$0xff]
      %v625 = vld [vmem:[#allocation9 + $0xe8] sm:$0xff]
      %v626 = vld [vmem:[#allocation9 + $0xf0] sm:$0xff]
      %v627 = vld [vmem:[#allocation9 + $0xf8] sm:$0xff]
      %v628 = vstv %s595
      %v629 = vmul.f32 %v628, %v596
      %v630 = vmul.f32 %v628, %v597
      %v631 = vmul.f32 %v628, %v598
      %v632 = vmul.f32 %v628, %v599
      %v633 = vmul.f32 %v628, %v600
      %v634 = vmul.f32 %v628, %v601
      %v635 = vmul.f32 %v628, %v602
      %v636 = vmul.f32 %v628, %v603
      %v637 = vmul.f32 %v628, %v604
      %v638 = vmul.f32 %v628, %v605
      %v639 = vmul.f32 %v628, %v606
      %v640 = vmul.f32 %v628, %v607
      %v641 = vmul.f32 %v628, %v608
      %v642 = vmul.f32 %v628, %v609
      %v643 = vmul.f32 %v628, %v610
      %v644 = vmul.f32 %v628, %v611
      %v645 = vmul.f32 %v628, %v612
      %v646 = vmul.f32 %v628, %v613
      %v647 = vmul.f32 %v628, %v614
      %v648 = vmul.f32 %v628, %v615
      %v649 = vmul.f32 %v628, %v616
      %v650 = vmul.f32 %v628, %v617
      %v651 = vmul.f32 %v628, %v618
      %v652 = vmul.f32 %v628, %v619
      %v653 = vmul.f32 %v628, %v620
      %v654 = vmul.f32 %v628, %v621
      %v655 = vmul.f32 %v628, %v622
      %v656 = vmul.f32 %v628, %v623
      %v657 = vmul.f32 %v628, %v624
      %v658 = vmul.f32 %v628, %v625
      %v659 = vmul.f32 %v628, %v626
      %v660 = vmul.f32 %v628, %v627
      %s661 = ssub.f32 1.0, %s595
      %v662 = vld [vmem:[#allocation10] sm:$0xff]
      %v663 = vld [vmem:[#allocation10 + $0x8] sm:$0xff]
      %v664 = vld [vmem:[#allocation10 + $0x10] sm:$0xff]
      %v665 = vld [vmem:[#allocation10 + $0x18] sm:$0xff]
      %v666 = vld [vmem:[#allocation10 + $0x20] sm:$0xff]
      %v667 = vld [vmem:[#allocation10 + $0x28] sm:$0xff]
      %v668 = vld [vmem:[#allocation10 + $0x30] sm:$0xff]
      %v669 = vld [vmem:[#allocation10 + $0x38] sm:$0xff]
      %v670 = vld [vmem:[#allocation10 + $0x40] sm:$0xff]
      %v671 = vld [vmem:[#allocation10 + $0x48] sm:$0xff]
      %v672 = vld [vmem:[#allocation10 + $0x50] sm:$0xff]
      %v673 = vld [vmem:[#allocation10 + $0x58] sm:$0xff]
      %v674 = vld [vmem:[#allocation10 + $0x60] sm:$0xff]
      %v675 = vld [vmem:[#allocation10 + $0x68] sm:$0xff]
      %v676 = vld [vmem:[#allocation10 + $0x70] sm:$0xff]
      %v677 = vld [vmem:[#allocation10 + $0x78] sm:$0xff]
      %v678 = vld [vmem:[#allocation10 + $0x80] sm:$0xff]
      %v679 = vld [vmem:[#allocation10 + $0x88] sm:$0xff]
      %v680 = vld [vmem:[#allocation10 + $0x90] sm:$0xff]
      %v681 = vld [vmem:[#allocation10 + $0x98] sm:$0xff]
      %v682 = vld [vmem:[#allocation10 + $0xa0] sm:$0xff]
      %v683 = vld [vmem:[#allocation10 + $0xa8] sm:$0xff]
      %v684 = vld [vmem:[#allocation10 + $0xb0] sm:$0xff]
      %v685 = vld [vmem:[#allocation10 + $0xb8] sm:$0xff]
      %v686 = vld [vmem:[#allocation10 + $0xc0] sm:$0xff]
      %v687 = vld [vmem:[#allocation10 + $0xc8] sm:$0xff]
      %v688 = vld [vmem:[#allocation10 + $0xd0] sm:$0xff]
      %v689 = vld [vmem:[#allocation10 + $0xd8] sm:$0xff]
      %v690 = vld [vmem:[#allocation10 + $0xe0] sm:$0xff]
      %v691 = vld [vmem:[#allocation10 + $0xe8] sm:$0xff]
      %v692 = vld [vmem:[#allocation10 + $0xf0] sm:$0xff]
      %v693 = vld [vmem:[#allocation10 + $0xf8] sm:$0xff]
      %v694 = vstv %s661
      %v695 = vmul.f32 %v694, %v662
      %v696 = vmul.f32 %v694, %v663
      %v697 = vmul.f32 %v694, %v664
      %v698 = vmul.f32 %v694, %v665
      %v699 = vmul.f32 %v694, %v666
      %v700 = vmul.f32 %v694, %v667
      %v701 = vmul.f32 %v694, %v668
      %v702 = vmul.f32 %v694, %v669
      %v703 = vmul.f32 %v694, %v670
      %v704 = vmul.f32 %v694, %v671
      %v705 = vmul.f32 %v694, %v672
      %v706 = vmul.f32 %v694, %v673
      %v707 = vmul.f32 %v694, %v674
      %v708 = vmul.f32 %v694, %v675
      %v709 = vmul.f32 %v694, %v676
      %v710 = vmul.f32 %v694, %v677
      %v711 = vmul.f32 %v694, %v678
      %v712 = vmul.f32 %v694, %v679
      %v713 = vmul.f32 %v694, %v680
      %v714 = vmul.f32 %v694, %v681
      %v715 = vmul.f32 %v694, %v682
      %v716 = vmul.f32 %v694, %v683
      %v717 = vmul.f32 %v694, %v684
      %v718 = vmul.f32 %v694, %v685
      %v719 = vmul.f32 %v694, %v686
      %v720 = vmul.f32 %v694, %v687
      %v721 = vmul.f32 %v694, %v688
      %v722 = vmul.f32 %v694, %v689
      %v723 = vmul.f32 %v694, %v690
      %v724 = vmul.f32 %v694, %v691
      %v725 = vmul.f32 %v694, %v692
      %v726 = vmul.f32 %v694, %v693
      %v727 = vadd.f32 %v629, %v695
      %v728 = vadd.f32 %v630, %v696
      %v729 = vadd.f32 %v631, %v697
      %v730 = vadd.f32 %v632, %v698
      %v731 = vadd.f32 %v633, %v699
      %v732 = vadd.f32 %v634, %v700
      %v733 = vadd.f32 %v635, %v701
      %v734 = vadd.f32 %v636, %v702
      %v735 = vadd.f32 %v637, %v703
      %v736 = vadd.f32 %v638, %v704
      %v737 = vadd.f32 %v639, %v705
      %v738 = vadd.f32 %v640, %v706
      %v739 = vadd.f32 %v641, %v707
      %v740 = vadd.f32 %v642, %v708
      %v741 = vadd.f32 %v643, %v709
      %v742 = vadd.f32 %v644, %v710
      %v743 = vadd.f32 %v645, %v711
      %v744 = vadd.f32 %v646, %v712
      %v745 = vadd.f32 %v647, %v713
      %v746 = vadd.f32 %v648, %v714
      %v747 = vadd.f32 %v649, %v715
      %v748 = vadd.f32 %v650, %v716
      %v749 = vadd.f32 %v651, %v717
      %v750 = vadd.f32 %v652, %v718
      %v751 = vadd.f32 %v653, %v719
      %v752 = vadd.f32 %v654, %v720
      %v753 = vadd.f32 %v655, %v721
      %v754 = vadd.f32 %v656, %v722
      %v755 = vadd.f32 %v657, %v723
      %v756 = vadd.f32 %v658, %v724
      %v757 = vadd.f32 %v659, %v725
      %v758 = vadd.f32 %v660, %v726
      %759 = vst [vmem:[#allocation10] sm:$0xff] %v727
      %760 = vst [vmem:[#allocation10 + $0x8] sm:$0xff] %v728
      %761 = vst [vmem:[#allocation10 + $0x10] sm:$0xff] %v729
      %762 = vst [vmem:[#allocation10 + $0x18] sm:$0xff] %v730
      %763 = vst [vmem:[#allocation10 + $0x20] sm:$0xff] %v731
      %764 = vst [vmem:[#allocation10 + $0x28] sm:$0xff] %v732
      %765 = vst [vmem:[#allocation10 + $0x30] sm:$0xff] %v733
      %766 = vst [vmem:[#allocation10 + $0x38] sm:$0xff] %v734
      %767 = vst [vmem:[#allocation10 + $0x40] sm:$0xff] %v735
      %768 = vst [vmem:[#allocation10 + $0x48] sm:$0xff] %v736
      %769 = vst [vmem:[#allocation10 + $0x50] sm:$0xff] %v737
      %770 = vst [vmem:[#allocation10 + $0x58] sm:$0xff] %v738
      %771 = vst [vmem:[#allocation10 + $0x60] sm:$0xff] %v739
      %772 = vst [vmem:[#allocation10 + $0x68] sm:$0xff] %v740
      %773 = vst [vmem:[#allocation10 + $0x70] sm:$0xff] %v741
      %774 = vst [vmem:[#allocation10 + $0x78] sm:$0xff] %v742
      %775 = vst [vmem:[#allocation10 + $0x80] sm:$0xff] %v743
      %776 = vst [vmem:[#allocation10 + $0x88] sm:$0xff] %v744
      %777 = vst [vmem:[#allocation10 + $0x90] sm:$0xff] %v745
      %778 = vst [vmem:[#allocation10 + $0x98] sm:$0xff] %v746
      %779 = vst [vmem:[#allocation10 + $0xa0] sm:$0xff] %v747
      %780 = vst [vmem:[#allocation10 + $0xa8] sm:$0xff] %v748
      %781 = vst [vmem:[#allocation10 + $0xb0] sm:$0xff] %v749
      %782 = vst [vmem:[#allocation10 + $0xb8] sm:$0xff] %v750
      %783 = vst [vmem:[#allocation10 + $0xc0] sm:$0xff] %v751
      %784 = vst [vmem:[#allocation10 + $0xc8] sm:$0xff] %v752
      %785 = vst [vmem:[#allocation10 + $0xd0] sm:$0xff] %v753
      %786 = vst [vmem:[#allocation10 + $0xd8] sm:$0xff] %v754
      %787 = vst [vmem:[#allocation10 + $0xe0] sm:$0xff] %v755
      %788 = vst [vmem:[#allocation10 + $0xe8] sm:$0xff] %v756
      %789 = vst [vmem:[#allocation10 + $0xf0] sm:$0xff] %v757
      %790 = vst [vmem:[#allocation10 + $0xf8] sm:$0xff] %v758
    $region33: #{tpu_custom_call.1} parent=1 // pred_fallthru
      _
    // Predicated region
    $region34: #{tpu_custom_call.1} parent=1 // pred_check
      _
    $region35: #{tpu_custom_call.1} parent=1 // pred_check_branch
      %792 = sbr.rel (0) target = $region37
    $region36: #{tpu_custom_call.1} parent=1 // pred_region
      %s794 = ssub.s32 4096, 4096
      %795 = vsyncadd [#allocation6], %s794
      %s796 = sshll.u32 [#allocation10], 4
      %s797 = int_to_ptr.vmem [resolvable:$true] %s796
      %802 = dma.vmem_to_hbm [thread:$0]  %s797, 4096, %s4, [#allocation6], 128, 128, 8
    $region37: #{tpu_custom_call.1} parent=1 // pred_fallthru
      _
    // Predicated region
    $region38: #{tpu_custom_call.1} parent=1 // pred_check
      _
    $region39: #{tpu_custom_call.1} parent=1 // pred_check_branch
      %804 = sbr.rel (0) target = $region41
    $region40: #{tpu_custom_call.1} parent=1 // pred_region
      %805 = dma.done [#allocation6], 4096
    $region41: #{tpu_custom_call.1} parent=1 // pred_fallthru
      _
    %806 = vsyncpa [#allocation5], 1
    %807 = vsyncpa [#allocation8], 1
    %808 = vsyncpa [#allocation6], 1

</llo_original>
